<compile_context>
chip_gen: v6e
topology: v6e:2x2x1
jax: 0.10.0
libtpu: 0.0.40
codegen_flags: <defaults>
</compile_context>

<pallas_src>
import functools

import jax
import jax.numpy as jnp
from jax import lax
from jax.experimental import pallas as pl
from jax.experimental.pallas import tpu as pltpu


def _pick_tile(n, target=512):
    """Largest tile <= target dividing n; keeps lane dims 128-friendly."""
    if n <= target:
        return n
    for t in (512, 384, 256, 128):
        if n % t == 0:
            return t
    return n


# ----------------------------------------------------------------------------
# Kernel 1: negative squared pairwise distance (kNN score matrix), tiled.
#   pd[b, i, j] = 2 <x_i, x_j> - ||x_i||^2 - ||x_j||^2
# Data stays in its natural (B, C, N) layout; the contraction is over C
# (dot_general, no in-kernel transpose).
# ----------------------------------------------------------------------------
def _pdist_kernel(xi_ref, xj_ref, o_ref):
    # xi_ref: (1, C, Ti)   xj_ref: (1, C, Tj)   o_ref: (1, Ti, Tj)
    xi = xi_ref[0].astype(jnp.float32)
    xj = xj_ref[0].astype(jnp.float32)
    g = lax.dot_general(xi, xj, (((0,), (0,)), ((), ())),
                        preferred_element_type=jnp.float32)        # (Ti, Tj)
    xxi = jnp.sum(xi * xi, axis=0)                                  # (Ti,)
    xxj = jnp.sum(xj * xj, axis=0)                                  # (Tj,)
    o_ref[0] = 2.0 * g - xxi[:, None] - xxj[None, :]


def pairwise_neg_sqdist(data, *, tile=512):
    # data: (B, C, N) -> (B, N, N) float32
    B, C, N = data.shape
    T = _pick_tile(N, tile)
    nt = N // T
    return pl.pallas_call(
        _pdist_kernel,
        out_shape=jax.ShapeDtypeStruct((B, N, N), jnp.float32),
        grid=(B, nt, nt),
        in_specs=[
            pl.BlockSpec((1, C, T), lambda b, i, j: (b, 0, i)),
            pl.BlockSpec((1, C, T), lambda b, i, j: (b, 0, j)),
        ],
        out_specs=pl.BlockSpec((1, T, T), lambda b, i, j: (b, i, j)),
        compiler_params=pltpu.CompilerParams(
            dimension_semantics=("parallel", "parallel", "parallel")),
    )(data, data)


# ----------------------------------------------------------------------------
# Kernel 2: fused neighbor gather + 1x1 conv, channel-first, tiled over N.
# Emits max_j / min_j of the raw conv output plus per-tile BN statistics.
# ----------------------------------------------------------------------------
def _edgeconv_gather_kernel(idx_ref, pts_ref, ctr_ref, wa_ref, wd_ref,
                            ymax_ref, ymin_ref, s1_ref, s2_ref):
    # idx_ref: (1, k, TN) int32  neighbor ids (global point index) of this tile
    # pts_ref: (1, C, N)         full point cloud of batch b (resident over tiles)
    # ctr_ref: (1, C, TN)        this tile's center points
    # wa_ref:  (C, C_out)        W[:, :C]^T           (neighbor-feature part)
    # wd_ref:  (C, C_out)        (W[:, C:] - W[:, :C])^T   (center part)
    # ymax/ymin_ref: (1, C_out, TN)   running max / min over the k neighbors
    # s1/s2_ref:     (1, 1, C_out, 1) per-tile sum / sum-of-squares (BN stats)
    ids = idx_ref[0]                          # (k, TN) int32
    pts = pts_ref[0].astype(jnp.float32)      # (C, N)
    ctr = ctr_ref[0].astype(jnp.float32)      # (C, TN)
    k = ids.shape[0]
    n_pts = pts.shape[1]
    tn = ctr.shape[1]

    # Conv decomposition: y[c, n, j] = pa[c, idx[n, j]] + q[c, n]
    pa = lax.dot_general(wa_ref[...], pts, (((0,), (0,)), ((), ())),
                         preferred_element_type=jnp.float32)       # (C_out, N)
    q = lax.dot_general(wd_ref[...], ctr, (((0,), (0,)), ((), ())),
                        preferred_element_type=jnp.float32)        # (C_out, TN)

    row = lax.broadcasted_iota(jnp.int32, (n_pts, tn), 0)          # hoisted

    def neighbor(j):
        # One-hot MXU gather of columns of pa: g[c, n] = pa[c, idx[n, j]].
        # TODO(synk): for very large N a dynamic-gather / DMA gather would
        # avoid the (N, TN) one-hot temporary; at realistic DGCNN sizes it
        # fits VMEM comfortably and always lowers.
        sel = (row == ids[j:j + 1, :]).astype(jnp.float32)          # (N, TN)
        g = lax.dot_general(pa, sel, (((1,), (0,)), ((), ())),
                            preferred_element_type=jnp.float32)     # (C_out, TN)
        return g + q

    y = neighbor(0)
    ymax = y
    ymin = y
    s1 = jnp.sum(y, axis=1, keepdims=True)
    s2 = jnp.sum(y * y, axis=1, keepdims=True)
    for j in range(1, k):                       # k is small (4-20): static unroll
        y = neighbor(j)
        ymax = jnp.maximum(ymax, y)
        ymin = jnp.minimum(ymin, y)
        s1 = s1 + jnp.sum(y, axis=1, keepdims=True)
        s2 = s2 + jnp.sum(y * y, axis=1, keepdims=True)

    ymax_ref[0] = ymax
    ymin_ref[0] = ymin
    s1_ref[0, 0] = s1
    s2_ref[0, 0] = s2


# ----------------------------------------------------------------------------
# Kernel 3: BatchNorm (folded scale/bias) + LeakyReLU + "max over k" finalize.
# max_j LeakyReLU(s*y + b) == LeakyReLU(s * (max_j y if s > 0 else min_j y) + b)
# Output is written channel-first (lane-dense) -> no XLA transpose afterwards.
# ----------------------------------------------------------------------------
def _bn_lrelu_max_kernel(ymax_ref, ymin_ref, scale_ref, bias_ref, o_ref, *, slope):
    s = scale_ref[...]                                   # (C_out, 1)
    b = bias_ref[...]                                    # (C_out, 1)
    y = jnp.where(s > 0, ymax_ref[0], ymin_ref[0]) * s + b
    o_ref[0] = jnp.where(y > 0, y, slope * y).astype(o_ref.dtype)


def edge_conv_forward(data, w, gamma, beta, *, k, eps=1e-5, slope=0.2, tile=512):
    """EdgeConv forward (train-mode BatchNorm = batch statistics, as in a
    freshly constructed PyTorch module).

    data: (B, C, N) f32, w: (C_out, 2C, 1, 1) -> (B, C_out, N) f32
    """
    B, C, N = data.shape
    c_out = w.shape[0]
    TN = _pick_tile(N, tile)
    nt = N // TN

    # --- kNN: scores in Pallas, selection in JAX ------------------------------
    pd = pairwise_neg_sqdist(data, tile=tile)              # (B, N, N)
    # TODO(synk): torch.topk tie-breaking order is not bit-reproduced by
    # jax.lax.top_k (top-k has no clean Pallas TPU primitive).
    idx = lax.top_k(pd, k)[1].astype(jnp.int32)            # (B, N, k)
    idx_t = jnp.transpose(idx, (0, 2, 1))                  # (B, k, N), tiny int32

    # --- split the 1x1-conv weight for the fused kernel -----------------------
    w2 = w.reshape(c_out, 2 * C).astype(jnp.float32)
    wa = jnp.transpose(w2[:, :C])                          # (C, C_out)
    wd = jnp.transpose(w2[:, C:] - w2[:, :C])              # (C, C_out)

    ymax, ymin, s1, s2 = pl.pallas_call(
        _edgeconv_gather_kernel,
        out_shape=(
            jax.ShapeDtypeStruct((B, c_out, N), jnp.float32),      # max_j conv
            jax.ShapeDtypeStruct((B, c_out, N), jnp.float32),      # min_j conv
            jax.ShapeDtypeStruct((B, nt, c_out, 1), jnp.float32),  # sum
            jax.ShapeDtypeStruct((B, nt, c_out, 1), jnp.float32),  # sum of sq
        ),
        grid=(B, nt),
        in_specs=[
            pl.BlockSpec((1, k, TN), lambda b, t: (b, 0, t)),
            pl.BlockSpec((1, C, N), lambda b, t: (b, 0, 0)),   # full cloud, resident
            pl.BlockSpec((1, C, TN), lambda b, t: (b, 0, t)),  # tile centers
            pl.BlockSpec((C, c_out), lambda b, t: (0, 0)),
            pl.BlockSpec((C, c_out), lambda b, t: (0, 0)),
        ],
        out_specs=(
            pl.BlockSpec((1, c_out, TN), lambda b, t: (b, 0, t)),
            pl.BlockSpec((1, c_out, TN), lambda b, t: (b, 0, t)),
            pl.BlockSpec((1, 1, c_out, 1), lambda b, t: (b, t, 0, 0)),
            pl.BlockSpec((1, 1, c_out, 1), lambda b, t: (b, t, 0, 0)),
        ),
        compiler_params=pltpu.CompilerParams(
            dimension_semantics=("parallel", "parallel")),
    )(idx_t, data, data, wa, wd)

    # --- train-mode BatchNorm statistics over (B, N, k) -----------------------
    cnt = float(B * N * k)
    mean = jnp.sum(s1, axis=(0, 1))[:, 0] / cnt                      # (C_out,)
    var = jnp.maximum(jnp.sum(s2, axis=(0, 1))[:, 0] / cnt - mean * mean, 0.0)
    scale = gamma / jnp.sqrt(var + eps)
    bias = beta - mean * scale

    out = pl.pallas_call(
        functools.partial(_bn_lrelu_max_kernel, slope=slope),
        out_shape=jax.ShapeDtypeStruct((B, c_out, N), jnp.float32),
        grid=(B, nt),
        in_specs=[
            pl.BlockSpec((1, c_out, TN), lambda b, t: (b, 0, t)),
            pl.BlockSpec((1, c_out, TN), lambda b, t: (b, 0, t)),
            pl.BlockSpec((c_out, 1), lambda b, t: (0, 0)),
            pl.BlockSpec((c_out, 1), lambda b, t: (0, 0)),
        ],
        out_specs=pl.BlockSpec((1, c_out, TN), lambda b, t: (b, 0, t)),
        compiler_params=pltpu.CompilerParams(
            dimension_semantics=("parallel", "parallel")),
    )(ymax, ymin, scale[:, None], bias[:, None])
    return out                                                       # (B, C_out, N)


# ----------------------------------------------------------------------------
# Pure-JAX reference (mirrors the PyTorch module, train-mode BatchNorm).
# ----------------------------------------------------------------------------
def _reference_forward(data, w, gamma, beta, *, k, eps=1e-5, slope=0.2):
    B, C, N = data.shape
    c_out = w.shape[0]
    w2 = w.reshape(c_out, 2 * C)
    inner = -2.0 * jnp.einsum("bci,bcj->bij", data, data)
    xx = jnp.sum(data * data, axis=1)
    pd = -xx[:, :, None] - inner - xx[:, None, :]
    idx = lax.top_k(pd, k)[1]
    xt = jnp.transpose(data, (0, 2, 1))                    # (B, N, C)
    feat = jax.vmap(lambda pts, ix: pts[ix])(xt, idx)      # (B, N, k, C)
    ctr = jnp.broadcast_to(xt[:, :, None, :], feat.shape)
    edge = jnp.concatenate([feat - ctr, ctr], axis=-1)     # (B, N, k, 2C)
    y = jnp.einsum("bnjc,oc->bnjo", edge, w2)              # (B, N, k, C_out)
    mean = jnp.mean(y, axis=(0, 1, 2))
    var = jnp.var(y, axis=(0, 1, 2))                       # biased, as in training
    yh = (y - mean) / jnp.sqrt(var + eps) * gamma + beta
    yh = jnp.where(yh > 0, yh, slope * yh)
    return jnp.transpose(jnp.max(yh, axis=2), (0, 2, 1))   # (B, C_out, N)


if __name__ == "__main__":
    key = jax.random.PRNGKey(0)
    B, C, N = 2, 4, 16        # batch, point channels, num points
    k_nn = 4                  # neighbors
    c_out = 32

    kd, kw, kg, kb = jax.random.split(key, 4)
    data = jax.random.normal(kd, (B, C, N), dtype=jnp.float32)
    # nn.Conv2d(2C, c_out, 1, bias=False) weight; BatchNorm2d(c_out) affine.
    w = jax.random.normal(kw, (c_out, 2 * C, 1, 1), dtype=jnp.float32) / jnp.sqrt(2.0 * C)
    gamma = 1.0 + 0.1 * jax.random.normal(kg, (c_out,), dtype=jnp.float32)
    beta = 0.1 * jax.random.normal(kb, (c_out,), dtype=jnp.float32)

    out = edge_conv_forward(data, w, gamma, beta, k=k_nn)
    out = jax.block_until_ready(out)
    assert out.shape == (B, c_out, N), out.shape
    assert bool(jnp.all(jnp.isfinite(out)))

    ref = jax.block_until_ready(_reference_forward(data, w, gamma, beta, k=k_nn))
    assert bool(jnp.allclose(out, ref, atol=2e-3, rtol=2e-3)), (
        float(jnp.max(jnp.abs(out - ref))))
    print("KERNEL_OK")
</pallas_src>

<mosaic_0001>
module attributes {stable_mosaic.version = 11 : i64} {
  func.func @_pdist_kernel(%arg0: i32, %arg1: i32, %arg2: i32, %arg3: memref<1x4x16xf32, #tpu.memory_space<vmem>>, %arg4: memref<1x4x16xf32, #tpu.memory_space<vmem>>, %arg5: memref<1x16x16xf32, #tpu.memory_space<vmem>>) attributes {dimension_semantics = [#tpu.dimension_semantics<parallel>, #tpu.dimension_semantics<parallel>, #tpu.dimension_semantics<parallel>], iteration_bounds = array<i64: 2, 1, 1>, scalar_prefetch = 0 : i64, scratch_operands = 0 : i64, tpu.core_type = #tpu.core_type<tc>, window_params = [{transform_indices = @transform_0, window_bounds = array<i64: 1, 4, 16>}, {transform_indices = @transform_1, window_bounds = array<i64: 1, 4, 16>}, {transform_indices = @transform_2, window_bounds = array<i64: 1, 16, 16>}]} {
    %c0 = arith.constant 0 : index
    %c0_0 = arith.constant 0 : index
    %c0_1 = arith.constant 0 : index
    %0 = vector.load %arg3[%c0, %c0_0, %c0_1] : memref<1x4x16xf32, #tpu.memory_space<vmem>>, vector<1x4x16xf32>
    %1 = vector.shape_cast %0 : vector<1x4x16xf32> to vector<4x16xf32>
    %c0_2 = arith.constant 0 : index
    %c0_3 = arith.constant 0 : index
    %c0_4 = arith.constant 0 : index
    %2 = vector.load %arg4[%c0_2, %c0_3, %c0_4] : memref<1x4x16xf32, #tpu.memory_space<vmem>>, vector<1x4x16xf32>
    %3 = vector.shape_cast %2 : vector<1x4x16xf32> to vector<4x16xf32>
    %cst = arith.constant dense<0.000000e+00> : vector<16x16xf32>
    %4 = tpu.matmul %1, %3, %cst {dimension_numbers = #tpu.dot_dimension_numbers<[0], [0], [1], [1], [0, 1, 1, 1], [], []>} : vector<4x16xf32>, vector<4x16xf32>, vector<16x16xf32> -> vector<16x16xf32>
    %5 = arith.mulf %1, %1 : vector<4x16xf32>
    %cst_5 = arith.constant dense<0.000000e+00> : vector<16xf32>
    %6 = vector.multi_reduction <add>, %5, %cst_5 [0] : vector<4x16xf32> to vector<16xf32>
    %7 = arith.mulf %3, %3 : vector<4x16xf32>
    %cst_6 = arith.constant dense<0.000000e+00> : vector<16xf32>
    %8 = vector.multi_reduction <add>, %7, %cst_6 [0] : vector<4x16xf32> to vector<16xf32>
    %cst_7 = arith.constant 2.000000e+00 : f32
    %9 = vector.broadcast %cst_7 : f32 to vector<16x16xf32>
    %10 = arith.mulf %9, %4 : vector<16x16xf32>
    %11 = vector.shape_cast %6 : vector<16xf32> to vector<16x1xf32>
    %12 = vector.broadcast %11 : vector<16x1xf32> to vector<16x16xf32>
    %13 = arith.subf %10, %12 : vector<16x16xf32>
    %14 = vector.shape_cast %8 : vector<16xf32> to vector<1x16xf32>
    %15 = vector.broadcast %14 : vector<1x16xf32> to vector<16x16xf32>
    %16 = arith.subf %13, %15 : vector<16x16xf32>
    %c0_8 = arith.constant 0 : index
    %c0_9 = arith.constant 0 : index
    %c0_10 = arith.constant 0 : index
    %17 = vector.load %arg5[%c0_8, %c0_9, %c0_10] : memref<1x16x16xf32, #tpu.memory_space<vmem>>, vector<1x16x16xf32>
    %18 = vector.shape_cast %17 : vector<1x16x16xf32> to vector<16x16xf32>
    %19 = vector.shape_cast %16 : vector<16x16xf32> to vector<1x16x16xf32>
    tpu.vector_store %arg5[%c0_8, %c0_9, %c0_10], %19 {strides = array<i32>} : memref<1x16x16xf32, #tpu.memory_space<vmem>>, vector<1x16x16xf32>,
    return
  }
  func.func @transform_0(%arg0: i32, %arg1: i32, %arg2: i32) -> (i32, i32, i32) {
    %c0_i32 = arith.constant 0 : i32
    %c0_i32_0 = arith.constant 0 : i32
    return %arg0, %c0_i32, %arg1 : i32, i32, i32
  }
  func.func @transform_1(%arg0: i32, %arg1: i32, %arg2: i32) -> (i32, i32, i32) {
    %c0_i32 = arith.constant 0 : i32
    %c0_i32_0 = arith.constant 0 : i32
    return %arg0, %c0_i32, %arg2 : i32, i32, i32
  }
  func.func @transform_2(%arg0: i32, %arg1: i32, %arg2: i32) -> (i32, i32, i32) {
    %c0_i32 = arith.constant 0 : i32
    return %arg0, %arg1, %arg2 : i32, i32, i32
  }
}

</mosaic_0001>

<llo_original>
// kernel: tpu_custom_call.1
$region0: #{tpu_custom_call.1}
  #allocation0 [shape = 'u32[]', space=smem, size = 0x4, offset = 0x4, fixed_abs, tag = 'smem constant byte address 0x4 - core index']
  #allocation1 [shape = 'u32[144,128]{1,0:T(1,128)}', space=vmem, size = 0x12000, scoped, tag = 'internal scratch']
  %s0 = inlined_call_operand.hbm [shape: f32[2,4,16], index: 0, kind: input, shape index: {}]
  %s1 = inlined_call_operand.hbm [shape: f32[2,4,16], index: 1, kind: input, shape index: {}]
  %s2 = inlined_call_operand.hbm [shape: f32[2,16,16], index: 2, kind: output, shape index: {}]
  %s3 = sld [smem:[#allocation0]]
  $region49: #{tpu_custom_call.1} parent=0
    _
  %s5 = ssub.s32 1, %s3
  %s6 = scalar_select 0, %s5, %s3
  $region1: #{tpu_custom_call.1} parent=0
    #allocation2 [shape = 'u8[4096]{0}', space=vmem, size = 0x1000, scoped, tag = 'input window, operand 0']
    #allocation3 [shape = 's32[2]{0}', space=sflag, size = 0x8, scoped, tag = 'scoped memory for tpu_custom_call.1']
    #allocation4 [shape = 's32[2]{0}', space=sflag, size = 0x8, scoped, tag = 'scoped memory for tpu_custom_call.1']
    #allocation5 [shape = 'u8[4096]{0}', space=vmem, size = 0x1000, scoped, tag = 'input window, operand 1']
    #allocation6 [shape = 's32[2]{0}', space=sflag, size = 0x8, scoped, tag = 'scoped memory for tpu_custom_call.1']
    #allocation7 [shape = 'u8[16384]{0}', space=vmem, size = 0x4000, scoped, tag = 'output window, operand 0']
    %7 = vsyncpa [#allocation3], 0
    %s8 = scalar_lea.sflag [#allocation3], 1
    %9 = vsyncpa %s8, 0
    %10 = vsyncpa [#allocation6], 0
    %s11 = scalar_lea.sflag [#allocation6], 1
    %12 = vsyncpa %s11, 0
    %13 = vsyncpa [#allocation4], 0
    %s14 = scalar_lea.sflag [#allocation4], 1
    %15 = vsyncpa %s14, 0
    loop: start=0, step=1, limit=4
    $region2: #{tpu_custom_call.1} parent=1 // loop_pre_header
      _
    $region3: #{tpu_custom_call.1} parent=1 // loop_header
      %s17 = sphi 0, %s21
      %p18 = scmp.ge.s32.totalorder %s17, 4
      %s24 = sphi 0, %s43
      %s25 = sphi 0, %s39
      %s26 = sphi 0, %s35
      %s27 = sphi 0, %s24
      %s28 = sphi 0, %s25
      %s29 = sphi 0, %s26
      %s30 = sphi 0, %s27
      %s31 = sphi 0, %s28
      %s32 = sphi 0, %s29
      %s48 = sphi 0, %s50
      %s51 = sphi 0, %s48
      %s52 = sphi 0, %s51
      %s68 = sphi 0, %s52
      %s76 = sphi 0, %s78
      %s79 = sphi 0, %s76
      %s80 = sphi 0, %s79
      %s96 = sphi 0, %s80
      %s106 = sphi 0, %s108
      %s109 = sphi 0, %s106
      %s110 = sphi 0, %s109
      %s126 = sphi 0, %s110
    $region4: #{tpu_custom_call.1} parent=1 // loop_header_branch
      %20 = sbr.rel (%p18) target = $region8
    $region5: #{tpu_custom_call.1} parent=1 // loop_body
      %s22 = ssub.s32 %s17, 1
      %s23 = ssub.s32 %s17, 2
      %s33 = sadd.s32 1, %s26
      %p34 = scmp.ge.s32.totalorder %s33, 1
      %s35 = scalar_select %p34, 0, %s33
      %s36 = sadd.s32 1, %s25
      %s37 = scalar_select %p34, %s36, %s25
      %p38 = scmp.ge.s32.totalorder %s37, 1
      %s39 = scalar_select %p38, 0, %s37
      %s40 = sadd.s32 1, %s24
      %s41 = scalar_select %p38, %s40, %s24
      %p42 = scmp.ge.s32.totalorder %s41, 2
      %s43 = scalar_select %p42, 0, %s41
      %s44 = ssub.s32 %s24, %s43
      %s45 = ssub.s32 %s25, %s39
      %s46 = sor.u32 %s44, %s45
      %p47 = scmp.eq.s32.totalorder %s46, 0
      %s49 = sadd.s32 %s48, 1
      %s50 = scalar_select %p47, %s48, %s49
      %p53 = pneg %p47
      %p54 = scmp.eq.s32.totalorder %s17, 1
      %p55 = por %p53, %p54
      %p56 = scmp.ne.s32.totalorder %s48, %s51
      %p57 = scmp.eq.s32.totalorder %s17, 0
      %p58 = por %p56, %p57
      %p59 = scmp.ne.s32.totalorder %s48, %s51
      %p60 = scmp.eq.s32.totalorder %s22, 1
      %p61 = por %p59, %p60
      %p62 = scmp.ne.s32.totalorder %s51, %s52
      %p63 = scmp.eq.s32.totalorder %s22, 0
      %p64 = por %p62, %p63
      %p65 = scmp.ne.s32.totalorder %s51, %s52
      %p66 = scmp.eq.s32.totalorder %s23, 1
      %p67 = por %p65, %p66
      %p69 = scmp.ne.s32.totalorder %s52, %s68
      %p70 = scmp.eq.s32.totalorder %s23, 0
      %p71 = por %p69, %p70
      %s72 = ssub.s32 %s24, %s43
      %s73 = ssub.s32 %s26, %s35
      %s74 = sor.u32 %s72, %s73
      %p75 = scmp.eq.s32.totalorder %s74, 0
      %s77 = sadd.s32 %s76, 1
      %s78 = scalar_select %p75, %s76, %s77
      %p81 = pneg %p75
      %p82 = scmp.eq.s32.totalorder %s17, 1
      %p83 = por %p81, %p82
      %p84 = scmp.ne.s32.totalorder %s76, %s79
      %p85 = scmp.eq.s32.totalorder %s17, 0
      %p86 = por %p84, %p85
      %p87 = scmp.ne.s32.totalorder %s76, %s79
      %p88 = scmp.eq.s32.totalorder %s22, 1
      %p89 = por %p87, %p88
      %p90 = scmp.ne.s32.totalorder %s79, %s80
      %p91 = scmp.eq.s32.totalorder %s22, 0
      %p92 = por %p90, %p91
      %p93 = scmp.ne.s32.totalorder %s79, %s80
      %p94 = scmp.eq.s32.totalorder %s23, 1
      %p95 = por %p93, %p94
      %p97 = scmp.ne.s32.totalorder %s80, %s96
      %p98 = scmp.eq.s32.totalorder %s23, 0
      %p99 = por %p97, %p98
      %s100 = ssub.s32 %s24, %s43
      %s101 = ssub.s32 %s25, %s39
      %s102 = sor.u32 %s100, %s101
      %s103 = ssub.s32 %s26, %s35
      %s104 = sor.u32 %s102, %s103
      %p105 = scmp.eq.s32.totalorder %s104, 0
      %s107 = sadd.s32 %s106, 1
      %s108 = scalar_select %p105, %s106, %s107
      %p111 = pneg %p105
      %p112 = scmp.eq.s32.totalorder %s17, 1
      %p113 = por %p111, %p112
      %p114 = scmp.ne.s32.totalorder %s106, %s109
      %p115 = scmp.eq.s32.totalorder %s17, 0
      %p116 = por %p114, %p115
      %p117 = scmp.ne.s32.totalorder %s106, %s109
      %p118 = scmp.eq.s32.totalorder %s22, 1
      %p119 = por %p117, %p118
      %p120 = scmp.ne.s32.totalorder %s109, %s110
      %p121 = scmp.eq.s32.totalorder %s22, 0
      %p122 = por %p120, %p121
      %p123 = scmp.ne.s32.totalorder %s109, %s110
      %p124 = scmp.eq.s32.totalorder %s23, 1
      %p125 = por %p123, %p124
      %p127 = scmp.ne.s32.totalorder %s110, %s126
      %p128 = scmp.eq.s32.totalorder %s23, 0
      %p129 = por %p127, %p128
      %p130 = scmp.le.s32.totalorder 1, %s17
      %p131 = scmp.lt.s32.totalorder %s17, 3
      %p132 = pnand %p130, %p131
      %p133 = pneg %p132
      // Predicated region
      $region9: #{tpu_custom_call.1} parent=5 // pred_check
        _
      $region10: #{tpu_custom_call.1} parent=5 // pred_check_branch
        %135 = sbr.rel (%p132) target = $region12
      $region11: #{tpu_custom_call.1} parent=5 // pred_region
        %s136 = ssub.s32 %s17, 1
      $region12: #{tpu_custom_call.1} parent=5 // pred_fallthru
        _
      %p137 = scmp.lt.s32.totalorder %s17, 2
      // Predicated region
      $region13: #{tpu_custom_call.1} parent=5 // pred_check
        %p138 = pneg %p137
      $region14: #{tpu_custom_call.1} parent=5 // pred_check_branch
        %140 = sbr.rel (%p138) target = $region16
      $region15: #{tpu_custom_call.1} parent=5 // pred_region
        // Predicated region
        $region17: #{tpu_custom_call.1} parent=15 // pred_check
          %p141 = pneg %p58
        $region18: #{tpu_custom_call.1} parent=15 // pred_check_branch
          %143 = sbr.rel (%p141) target = $region20
        $region19: #{tpu_custom_call.1} parent=15 // pred_region
          %s144 = sand.u32 %s48, 1
          %s145 = scalar_lea.sflag [#allocation3], %s144
          %s146 = sand.u32 %s48, 1
          %s147 = smul.addr %s146, 4
          %s148 = scalar_lea.vmem [#allocation2], %s147
          %s150 = ssub.s32 64, 64
          %151 = vsyncadd %s145, %s150
          %s152 = sadd.s32 %s25, %s24
          %s153 = smul.addr %s152, 64
          %s154 = scalar_lea.hbm %s0, %s153
          %s156 = sshll.u32 %s148, 4
          %s157 = int_to_ptr.vmem [resolvable:$true] %s156
          %159 = dma.hbm_to_vmem [thread:$0]  %s154, 64, %s157, %s145
        $region20: #{tpu_custom_call.1} parent=15 // pred_fallthru
          _
        // Predicated region
        $region21: #{tpu_custom_call.1} parent=15 // pred_check
          %p160 = pneg %p86
        $region22: #{tpu_custom_call.1} parent=15 // pred_check_branch
          %162 = sbr.rel (%p160) target = $region24
        $region23: #{tpu_custom_call.1} parent=15 // pred_region
          %s163 = sand.u32 %s76, 1
          %s164 = scalar_lea.sflag [#allocation6], %s163
          %s165 = sand.u32 %s76, 1
          %s166 = smul.addr %s165, 4
          %s167 = scalar_lea.vmem [#allocation5], %s166
          %s169 = ssub.s32 64, 64
          %170 = vsyncadd %s164, %s169
          %s171 = sadd.s32 %s26, %s24
          %s172 = smul.addr %s171, 64
          %s173 = scalar_lea.hbm %s1, %s172
          %s175 = sshll.u32 %s167, 4
          %s176 = int_to_ptr.vmem [resolvable:$true] %s175
          %178 = dma.hbm_to_vmem [thread:$0]  %s173, 64, %s176, %s164
        $region24: #{tpu_custom_call.1} parent=15 // pred_fallthru
          _
      $region16: #{tpu_custom_call.1} parent=5 // pred_fallthru
        _
      %p179 = scmp.le.s32.totalorder 1, %s17
      %p180 = scmp.lt.s32.totalorder %s17, 3
      %p181 = pnand %p179, %p180
      %p182 = pneg %p181
      // Predicated region
      $region25: #{tpu_custom_call.1} parent=5 // pred_check
        _
      $region26: #{tpu_custom_call.1} parent=5 // pred_check_branch
        %184 = sbr.rel (%p181) target = $region28
      $region27: #{tpu_custom_call.1} parent=5 // pred_region
        %s185 = ssub.s32 %s17, 1
        %s186 = sand.u32 %s51, 1
        %s187 = scalar_lea.sflag [#allocation3], %s186
        %s188 = sand.u32 %s51, 1
        %s189 = smul.addr %s188, 4
        %s190 = scalar_lea.vmem [#allocation2], %s189
        // Predicated region
        $region29: #{tpu_custom_call.1} parent=27 // pred_check
          %p191 = pneg %p64
        $region30: #{tpu_custom_call.1} parent=27 // pred_check_branch
          %193 = sbr.rel (%p191) target = $region32
        $region31: #{tpu_custom_call.1} parent=27 // pred_region
          %194 = dma.done %s187, 64
        $region32: #{tpu_custom_call.1} parent=27 // pred_fallthru
          _
        %s195 = sand.u32 %s79, 1
        %s196 = scalar_lea.sflag [#allocation6], %s195
        %s197 = sand.u32 %s79, 1
        %s198 = smul.addr %s197, 4
        %s199 = scalar_lea.vmem [#allocation5], %s198
        // Predicated region
        $region33: #{tpu_custom_call.1} parent=27 // pred_check
          %p200 = pneg %p92
        $region34: #{tpu_custom_call.1} parent=27 // pred_check_branch
          %202 = sbr.rel (%p200) target = $region36
        $region35: #{tpu_custom_call.1} parent=27 // pred_region
          %203 = dma.done %s196, 64
        $region36: #{tpu_custom_call.1} parent=27 // pred_fallthru
          _
        %s204 = sand.u32 %s51, 1
        %s205 = scalar_lea.sflag [#allocation3], %s204
        %s206 = sand.u32 %s51, 1
        %s207 = smul.addr %s206, 4
        %s208 = scalar_lea.vmem [#allocation2], %s207
        %p209 = pneg %p64
        %p210 = pneg %p61
        %s211 = sand.u32 %s79, 1
        %s212 = scalar_lea.sflag [#allocation6], %s211
        %s213 = sand.u32 %s79, 1
        %s214 = smul.addr %s213, 4
        %s215 = scalar_lea.vmem [#allocation5], %s214
        %p216 = pneg %p92
        %p217 = pneg %p89
        %p218 = pneg %p122
        %p219 = pneg %p119
        %s220 = sand.u32 %s109, 1
        %s221 = scalar_lea.sflag [#allocation4], %s220
        %s222 = sand.u32 %s109, 1
        %s223 = smul.addr %s222, 16
        %s224 = scalar_lea.vmem [#allocation7], %s223
        %s225 = smul.u32 2, %s28
        %v226 = vld [vmem:[%s190] sm:$0xf]
        %v227 = vld [vmem:[%s199] sm:$0xf]
        %228 = vxpose.xlu0.b32.start [1/16] %v226, 128
        %229 = vxpose.xlu0.b32.cont [2/16] 0.0, 128
        %230 = vxpose.xlu0.b32.cont [3/16] 0.0, 128
        %231 = vxpose.xlu0.b32.cont [4/16] 0.0, 128
        %232 = vxpose.xlu0.b32.cont [5/16] 0.0, 128
        %233 = vxpose.xlu0.b32.cont [6/16] 0.0, 128
        %234 = vxpose.xlu0.b32.cont [7/16] 0.0, 128
        %235 = vxpose.xlu0.b32.cont [8/16] 0.0, 128
        %236 = vxpose.xlu0.b32.cont [9/16] 0.0, 128
        %237 = vxpose.xlu0.b32.cont [10/16] 0.0, 128
        %238 = vxpose.xlu0.b32.cont [11/16] 0.0, 128
        %239 = vxpose.xlu0.b32.cont [12/16] 0.0, 128
        %240 = vxpose.xlu0.b32.cont [13/16] 0.0, 128
        %241 = vxpose.xlu0.b32.cont [14/16] 0.0, 128
        %242 = vxpose.xlu0.b32.cont [15/16] 0.0, 128
        %243 = vxpose.xlu0.b32.end [16/16] 0.0, 128
        %v244 = vpop.trf.xlu0
        %v245 = vpop.trf.xlu0
        %v246 = vpop.trf.xlu0
        %v247 = vpop.trf.xlu0
        %v248 = vpop.trf.xlu0
        %v249 = vpop.trf.xlu0
        %v250 = vpop.trf.xlu0
        %v251 = vpop.trf.xlu0
        %v252 = vpop.trf.xlu0
        %v253 = vpop.trf.xlu0
        %v254 = vpop.trf.xlu0
        %v255 = vpop.trf.xlu0
        %v256 = vpop.trf.xlu0
        %v257 = vpop.trf.xlu0
        %v258 = vpop.trf.xlu0
        %v259 = vpop.trf.xlu0
        %vm260 = vcmask 31744
        %v262 = vsel %vm260, %v244, 0
        %v265 = vsel %vm260, %v245, 0
        %vm267 = vcmask 1043456
        %v269 = vsel %vm267, %v227, 0
        %271 = vmatprep.subr.mxu0 0.0
        %272 = vmatpush1.msra.mxu0 0.0
        %273 = vmatprep.subr.mxu0 0.0
        %274 = vmatpush1.msra.mxu0 0.0
        %275 = vmatprep.subr.mxu0 0.0
        %276 = vmatpush1.msra.mxu0 0.0
        %277 = vmatprep.subr.mxu0 0.0
        %278 = vmatpush1.msra.mxu0 0.0
        %279 = vmatprep.subr.mxu0 0.0
        %280 = vmatpush1.msra.mxu0 0.0
        %281 = vmatprep.subr.mxu0 0.0
        %282 = vmatpush1.msra.mxu0 0.0
        %283 = vmatprep.subr.mxu0 0.0
        %284 = vmatpush1.msra.mxu0 0.0
        %285 = vmatprep.subr.mxu0 0.0
        %286 = vmatpush1.msra.mxu0 0.0
        %287 = vmatprep.subr.mxu0 0.0
        %288 = vmatpush1.msra.mxu0 0.0
        %289 = vmatprep.subr.mxu0 0.0
        %290 = vmatpush1.msra.mxu0 0.0
        %291 = vmatprep.subr.mxu0 0.0
        %292 = vmatpush1.msra.mxu0 0.0
        %293 = vmatprep.subr.mxu0 0.0
        %294 = vmatpush1.msra.mxu0 0.0
        %295 = vmatprep.subr.mxu0 0.0
        %296 = vmatpush1.msra.mxu0 0.0
        %297 = vmatprep.subr.mxu0 0.0
        %298 = vmatpush1.msra.mxu0 0.0
        %299 = vmatprep.subr.mxu0 0.0
        %300 = vmatpush1.msra.mxu0 0.0
        %301 = vmatprep.subr.mxu0 0.0
        %302 = vmatpush1.msra.mxu0 %v269
        %303 = vmatprep.subr.mxu0 0.0
        %304 = vmatpush2.msra.mxu0 0.0
        %305 = vmatprep.subr.mxu0 0.0
        %306 = vmatpush2.msra.mxu0 0.0
        %307 = vmatprep.subr.mxu0 0.0
        %308 = vmatpush2.msra.mxu0 0.0
        %309 = vmatprep.subr.mxu0 0.0
        %310 = vmatpush2.msra.mxu0 0.0
        %311 = vmatprep.subr.mxu0 0.0
        %312 = vmatpush2.msra.mxu0 0.0
        %313 = vmatprep.subr.mxu0 0.0
        %314 = vmatpush2.msra.mxu0 0.0
        %315 = vmatprep.subr.mxu0 0.0
        %316 = vmatpush2.msra.mxu0 0.0
        %317 = vmatprep.subr.mxu0 0.0
        %318 = vmatpush2.msra.mxu0 0.0
        %319 = vmatprep.subr.mxu0 0.0
        %320 = vmatpush2.msra.mxu0 0.0
        %321 = vmatprep.subr.mxu0 0.0
        %322 = vmatpush2.msra.mxu0 0.0
        %323 = vmatprep.subr.mxu0 0.0
        %324 = vmatpush2.msra.mxu0 0.0
        %325 = vmatprep.subr.mxu0 0.0
        %326 = vmatpush2.msra.mxu0 0.0
        %327 = vmatprep.subr.mxu0 0.0
        %328 = vmatpush2.msra.mxu0 0.0
        %329 = vmatprep.subr.mxu0 0.0
        %330 = vmatpush2.msra.mxu0 0.0
        %331 = vmatprep.subr.mxu0 0.0
        %332 = vmatpush2.msra.mxu0 0.0
        %333 = vmatprep.subr.mxu0 0.0
        %334 = vmatpush2.msra.mxu0 0.0
        %335 = vmatprep.mubr.f32.mxu0 0.0
        %336 = vmatmul.mubr.f32.gmra.mxu0 %v262
        %v337 = vpop.f32.mrf.mxu0
        %v338 = vadd.f32 0.0, %v337
        %v339 = vpop.f32.mrf.mxu0
        %340 = vmatprep.mubr.f32.mxu0 0.0
        %341 = vmatmul.mubr.f32.gmra.mxu0 %v265
        %v342 = vpop.f32.mrf.mxu0
        %v343 = vadd.f32 0.0, %v342
        %v344 = vpop.f32.mrf.mxu0
        %345 = vdwg.mxu0
        %v346 = vmul.f32 %v226, %v226
        %vm347 = vcmask 125952
        %v348 = vsel %vm347, %v346, 0.0
        %v349 = vrot.slane %v348, 4
        %v350 = vadd.f32 %v348, %v349
        %v351 = vrot.slane %v350, 2
        %v352 = vadd.f32 %v350, %v351
        %v353 = vrot.slane %v352, 1
        %v354 = vadd.f32 %v352, %v353
        %v355 = vmul.f32 %v227, %v227
        %v356 = vsel %vm347, %v355, 0.0
        %v357 = vrot.slane %v356, 4
        %v358 = vadd.f32 %v356, %v357
        %v359 = vrot.slane %v358, 2
        %v360 = vadd.f32 %v358, %v359
        %v361 = vrot.slane %v360, 1
        %v362 = vadd.f32 %v360, %v361
        %v363 = vmul.f32 %v338, 2.0
        %v364 = vmul.f32 %v343, 2.0
        %366 = vbcast.lane.b32.xlu0 %v354, 256
        %v367 = vpop.permute.xlu0 %366
        %s369 = sor.u32 256, 8
        %370 = vbcast.lane.b32.xlu0 %v354, %s369
        %v371 = vpop.permute.xlu0 %370
        %v372 = vsub.f32 %v363, %v367
        %v373 = vsub.f32 %v364, %v371
        %v374 = vsub.f32 %v372, %v362
        %v375 = vsub.f32 %v373, %v362
        %vm376 = vcmask 130048
        %377 = vst.msk [vmem:[%s224] sm:$0xff] %vm376, %v374
        %378 = vst.msk [vmem:[%s224 + $0x8] sm:$0xff] %vm376, %v375
        %s379 = sand.u32 %s109, 1
        %s380 = scalar_lea.sflag [#allocation4], %s379
        %s381 = sand.u32 %s109, 1
        %s382 = smul.addr %s381, 16
        %s383 = scalar_lea.vmem [#allocation7], %s382
        // Predicated region
        $region37: #{tpu_custom_call.1} parent=27 // pred_check
          %p384 = pneg %p119
        $region38: #{tpu_custom_call.1} parent=27 // pred_check_branch
          %386 = sbr.rel (%p384) target = $region40
        $region39: #{tpu_custom_call.1} parent=27 // pred_region
          %s387 = smul.u32 2, %s28
          %s389 = ssub.s32 256, 256
          %390 = vsyncadd %s380, %s389
          %s391 = sadd.s32 %s29, %s387
          %s392 = smul.addr %s27, 2
          %s393 = sadd.s32 %s391, %s392
          %s394 = smul.addr %s393, 128
          %s395 = scalar_lea.hbm %s2, %s394
          %s396 = sshll.u32 %s383, 4
          %s397 = int_to_ptr.vmem [resolvable:$true] %s396
          %402 = dma.vmem_to_hbm [thread:$0]  %s397, 256, %s395, %s380, 128, 128, 8
        $region40: #{tpu_custom_call.1} parent=27 // pred_fallthru
          _
      $region28: #{tpu_custom_call.1} parent=5 // pred_fallthru
        _
      %p403 = scmp.le.s32.totalorder 2, %s17
      // Predicated region
      $region41: #{tpu_custom_call.1} parent=5 // pred_check
        %p404 = pneg %p403
      $region42: #{tpu_custom_call.1} parent=5 // pred_check_branch
        %406 = sbr.rel (%p404) target = $region44
      $region43: #{tpu_custom_call.1} parent=5 // pred_region
        %s407 = ssub.s32 %s17, 2
        // Predicated region
        $region45: #{tpu_custom_call.1} parent=43 // pred_check
          %p408 = pneg %p125
        $region46: #{tpu_custom_call.1} parent=43 // pred_check_branch
          %410 = sbr.rel (%p408) target = $region48
        $region47: #{tpu_custom_call.1} parent=43 // pred_region
          %s411 = sand.u32 %s110, 1
          %s412 = scalar_lea.sflag [#allocation4], %s411
          %s413 = sand.u32 %s110, 1
          %s414 = smul.addr %s413, 16
          %s415 = scalar_lea.vmem [#allocation7], %s414
          %416 = dma.done %s412, 256
        $region48: #{tpu_custom_call.1} parent=43 // pred_fallthru
          _
      $region44: #{tpu_custom_call.1} parent=5 // pred_fallthru
        _
    $region6: #{tpu_custom_call.1} parent=1 // loop_footer
      %s21 = sadd.s32 1, %s17
    $region7: #{tpu_custom_call.1} parent=1 // loop_footer_branch
      %16 = sbr.rel target = $region3
    $region8: #{tpu_custom_call.1} parent=1 // loop_exit
      _
    %417 = vsyncpa [#allocation3], 1
    %s418 = scalar_lea.sflag [#allocation3], 1
    %419 = vsyncpa %s418, 1
    %420 = vsyncpa [#allocation6], 1
    %s421 = scalar_lea.sflag [#allocation6], 1
    %422 = vsyncpa %s421, 1
    %423 = vsyncpa [#allocation4], 1
    %s424 = scalar_lea.sflag [#allocation4], 1
    %425 = vsyncpa %s424, 1

</llo_original>
